<compile_context>
chip_gen: v5e
topology: v5e:2x2
jax: 0.10.0
libtpu: 0.0.40
codegen_flags: <defaults>
</compile_context>

<pallas_src>
import functools

import jax
import jax.numpy as jnp
from jax.experimental import pallas as pl
from jax.experimental.pallas import tpu as pltpu


def _sse_audio_kernel(
    x_ref,        # (TB, S, E)   f32  (cast to bf16 in-kernel)
    wqkv_ref,     # (E, 3E)      bf16  fused [Wq*scale | Wk | Wv] (pre-transposed)
    bqkv_ref,     # (1, 3E)      f32   fused [bq*scale | bk | bv]
    wo_ref,       # (E, E)       bf16  out-projection (pre-transposed)
    bo_ref,       # (1, E)       f32
    w1m_ref,      # (E, E/2)     bf16  mean-half of concat_linear weight
    w1s_ref,      # (E, E/2)     bf16  std-half of concat_linear weight
    b1_ref,       # (1, E/2)     f32
    w2_ref,       # (E/2, O)     bf16
    b2_ref,       # (1, O)       f32
    y_ref,        # (TB, O)      f32
    feat_ref,     # (TB, E/2)    f32
    *, num_heads: int,
):
    TB, S, E = x_ref.shape
    H = num_heads
    d = E // H
    M = TB * S
    bf16 = jnp.bfloat16

    # Cast to bf16 in-kernel (no separate HBM pass over x in the wrapper) and merge the
    # leading dims: (TB,S,E)->(TB*S,E) is layout-free and gives the MXU M=TB*S rows
    # instead of a per-batch loop of M=S matmuls.
    x2 = x_ref[...].astype(bf16).reshape(M, E)

    # ---- fused QKV in-projection: one wide (M,E)x(E,3E) MXU pass, f32 accumulation.
    # 1/sqrt(d) is pre-folded into the q columns of wqkv/bqkv; bias add + bf16 cast are
    # fused here so the f32 (M,3E) temp dies immediately.
    qkv = (jnp.dot(x2, wqkv_ref[...], preferred_element_type=jnp.float32)
           + bqkv_ref[...]).astype(bf16)                              # (M, 3E) bf16

    # ---- per-head scaled-dot-product attention ----
    # TODO(synk): for real audio lengths (S in the hundreds+) stream K-blocks with an
    # online (flash-style) softmax instead of materializing the (TB,S,S) scores.
    # TODO(synk): if d % 128 != 0 (e.g. E=768, H=8 -> d=96) the lane-dim head slices
    # below cost one XLU relayout per head; a head-major qkv layout would remove them.
    ctx_heads = []
    for h in range(H):
        qh = qkv[:, h * d:(h + 1) * d].reshape(TB, S, d)
        kh = qkv[:, E + h * d:E + (h + 1) * d].reshape(TB, S, d)
        vh = qkv[:, 2 * E + h * d:2 * E + (h + 1) * d].reshape(TB, S, d)

        s = jnp.einsum("bqd,bkd->bqk", qh, kh,
                       preferred_element_type=jnp.float32)            # (TB, S, S) f32
        s = s - jnp.max(s, axis=-1, keepdims=True)
        p = jnp.exp(s)
        denom = jnp.sum(p, axis=-1, keepdims=True)                    # (TB, S, 1)

        ctx = jnp.einsum("bqk,bkd->bqd", p.astype(bf16), vh,
                         preferred_element_type=jnp.float32)          # (TB, S, d)
        # Deferred normalization: scale the (S,d) context rather than the (S,S)
        # probabilities (d << S for real lengths); reciprocal stays on the EUP slot.
        ctx = ctx * pl.reciprocal(denom, approx=True)
        ctx_heads.append(ctx.astype(bf16).reshape(M, d))

    # Re-assemble heads and do ONE out-projection matmul with K=E (better MXU fill
    # than H matmuls with K=d on 256-deep MXUs).
    ctx_all = jnp.concatenate(ctx_heads, axis=-1)                     # (M, E) bf16
    attn = (jnp.dot(ctx_all, wo_ref[...], preferred_element_type=jnp.float32)
            + bo_ref[...]).reshape(TB, S, E)                          # (TB, S, E) f32

    # ---- std / mean pooling over the sequence dim (unbiased, matches torch.std_mean).
    # Note: S == 1 gives NaN std (Bessel correction), same as PyTorch.
    mean = jnp.mean(attn, axis=1)                                     # (TB, E)
    centered = attn - mean[:, None, :]
    inv_nm1 = (1.0 / (S - 1)) if S > 1 else float("nan")
    var = jnp.sum(centered * centered, axis=1) * inv_nm1
    std = jnp.sqrt(var)                                               # (TB, E)

    # ---- concat_linear: cat(mean, std) @ W1^T + b1  (W1 split -> no concat) ----
    feat = (jnp.dot(mean.astype(bf16), w1m_ref[...], preferred_element_type=jnp.float32)
            + jnp.dot(std.astype(bf16), w1s_ref[...], preferred_element_type=jnp.float32)
            + b1_ref[...])                                            # (TB, E/2)

    # ---- classifier ----
    y = (jnp.dot(feat.astype(bf16), w2_ref[...], preferred_element_type=jnp.float32)
         + b2_ref[...])                                               # (TB, O)

    feat_ref[...] = feat.astype(feat_ref.dtype)
    y_ref[...] = y.astype(y_ref.dtype)


def _vmem_capacity_bytes():
    """Trace-time query of physical VMEM (generation-aware budget)."""
    try:
        cap = getattr(pltpu.get_tpu_info(), "vmem_capacity_bytes", None)
        if cap:
            return int(cap)
    except Exception:  # pragma: no cover - conservative fallback if query unavailable
        pass
    return 64 * 2 ** 20  # v7x per-TC (smallest of the supported generations)


def _pick_batch_tile(B, per_batch_bytes, budget_bytes):
    """Largest divisor of B whose per-step footprint fits the budget.

    Preference order:
      1) tiles that are a multiple of 8 AND leave >= 2 grid steps (v7x: both
         TensorCores get work via the "parallel" batch axis),
      2) tiles equal to B or a multiple of 8 (clean (8,.) sublane tiling for the
         2-D (tb, feat) output blocks),
      3) the largest fitting divisor.
    """
    divisors = [t for t in range(1, B + 1) if B % t == 0]
    fitting = [t for t in divisors if t * per_batch_bytes <= budget_bytes] or [1]
    multicore = [t for t in fitting if B // t >= 2 and t % 8 == 0]
    if multicore:
        return max(multicore)
    preferred = [t for t in fitting if t == B or t % 8 == 0]
    return max(preferred) if preferred else max(fitting)


def pack_params(params, *, num_heads):
    """One-time weight packing (call once at model init, not per forward).

    Concatenates Wq|Wk|Wv into a fused (E,3E) matrix, folds 1/sqrt(d) into the q
    columns, and casts weights to bf16 (biases stay f32 for the accumulator add).
    """
    E = params["wq"].shape[0]
    d = E // num_heads
    scale = 1.0 / (float(d) ** 0.5)
    f32, bf16 = jnp.float32, jnp.bfloat16
    return {
        "wqkv": jnp.concatenate(
            [params["wq"] * scale, params["wk"], params["wv"]], axis=1).astype(bf16),
        "bqkv": jnp.concatenate(
            [params["bq"] * scale, params["bk"], params["bv"]], axis=1).astype(f32),
        "wo": params["wo"].astype(bf16),
        "bo": params["bo"].astype(f32),
        "w1m": params["w1m"].astype(bf16),
        "w1s": params["w1s"].astype(bf16),
        "b1": params["b1"].astype(f32),
        "w2": params["w2"].astype(bf16),
        "b2": params["b2"].astype(f32),
    }


def sse_audio_forward(x, packed, *, num_heads):
    """x: (B, S, E) float32.  packed: output of pack_params (pre-packed bf16 weights)."""
    B, S, E = x.shape
    H = num_heads
    d = E // H
    E2 = E // 2
    O = packed["w2"].shape[1]
    f32 = jnp.float32

    wqkv, bqkv = packed["wqkv"], packed["bqkv"]
    wo, bo = packed["wo"], packed["bo"]
    w1m, w1s, b1 = packed["w1m"], packed["w1s"], packed["b1"]
    w2, b2 = packed["w2"], packed["b2"]

    # ---- VMEM accounting (generation-aware) ----
    # Weights: resident but double-buffered by the pipeline (constant index_map).
    # TODO(synk): single-buffer the resident weights (pipeline_mode=pl.Buffered(1))
    # once verified on the target jax build; the budget below counts them x2.
    weight_bytes = sum(int(a.size) * a.dtype.itemsize
                       for a in (wqkv, bqkv, wo, bo, w1m, w1s, b1, w2, b2))
    # Per-batch-element activation footprint: only the x tile is double-buffered by
    # BlockSpec; the in-kernel intermediates are single-buffered.
    x_tile_b = S * E * 4                      # f32 x tile
    inter_b = (S * E * 2                      # bf16 x copy
               + S * 3 * E * 2                # bf16 fused qkv
               + 2 * S * S * 4                # scores + probs (one head live) f32
               + S * d * 4                    # ctx f32 (one head)
               + 2 * S * E * 2                # ctx heads (bf16) + lane-concat copy
               + S * E * 4)                   # attn f32
    per_batch_bytes = 2 * x_tile_b + inter_b

    cap = _vmem_capacity_bytes()
    usable = min(int(cap * 0.85), cap - (8 << 20))          # ~109 MiB v5e/v6e, ~54 MiB v7x
    act_budget = max(usable - 2 * weight_bytes, per_batch_bytes)
    tb = _pick_batch_tile(B, per_batch_bytes, act_budget)
    grid = (B // tb,)

    vmem_limit = int(min(usable,
                         max(32 * 2 ** 20,
                             2 * weight_bytes + tb * per_batch_bytes + (4 << 20))))

    kernel = functools.partial(_sse_audio_kernel, num_heads=num_heads)
    y, feat = pl.pallas_call(
        kernel,
        out_shape=(
            jax.ShapeDtypeStruct((B, O), f32),
            jax.ShapeDtypeStruct((B, E2), f32),
        ),
        grid=grid,
        in_specs=[
            pl.BlockSpec((tb, S, E), lambda b: (b, 0, 0)),      # x: tiled over batch
            pl.BlockSpec((E, 3 * E), lambda b: (0, 0)),         # weights: resident
            pl.BlockSpec((1, 3 * E), lambda b: (0, 0)),
            pl.BlockSpec((E, E), lambda b: (0, 0)),
            pl.BlockSpec((1, E), lambda b: (0, 0)),
            pl.BlockSpec((E, E2), lambda b: (0, 0)),
            pl.BlockSpec((E, E2), lambda b: (0, 0)),
            pl.BlockSpec((1, E2), lambda b: (0, 0)),
            pl.BlockSpec((E2, O), lambda b: (0, 0)),
            pl.BlockSpec((1, O), lambda b: (0, 0)),
        ],
        out_specs=(
            pl.BlockSpec((tb, O), lambda b: (b, 0)),
            pl.BlockSpec((tb, E2), lambda b: (b, 0)),
        ),
        compiler_params=pltpu.CompilerParams(
            dimension_semantics=("parallel",),   # independent batch tiles (2 TCs on v7x)
            vmem_limit_bytes=vmem_limit,
        ),
    )(x, wqkv, bqkv, wo, bo, w1m, w1s, b1, w2, b2)
    return y, feat


def _reference(x, p, num_heads):
    """Pure-JAX f32 reference mirroring the PyTorch forward (eval mode)."""
    B, S, E = x.shape
    d = E // num_heads
    q = x @ p["wq"] + p["bq"]
    k = x @ p["wk"] + p["bk"]
    v = x @ p["wv"] + p["bv"]
    qh = q.reshape(B, S, num_heads, d).transpose(0, 2, 1, 3)
    kh = k.reshape(B, S, num_heads, d).transpose(0, 2, 1, 3)
    vh = v.reshape(B, S, num_heads, d).transpose(0, 2, 1, 3)
    s = jnp.einsum("bhqd,bhkd->bhqk", qh, kh) / (d ** 0.5)
    pw = jax.nn.softmax(s, axis=-1)
    o = jnp.einsum("bhqk,bhkd->bhqd", pw, vh).transpose(0, 2, 1, 3).reshape(B, S, E)
    o = o @ p["wo"] + p["bo"]
    mean = jnp.mean(o, axis=1)
    std = jnp.sqrt(jnp.sum((o - mean[:, None, :]) ** 2, axis=1) / (S - 1))
    feat = mean @ p["w1m"] + std @ p["w1s"] + p["b1"]
    y = feat @ p["w2"] + p["b2"]
    return y, feat


def make_params(key, embed_size, output_dim):
    """Deterministic synthetic parameters (shapes from SSE_Audio.__init__)."""
    E = embed_size
    ks = jax.random.split(key, 12)
    scale = 0.05

    def rnd(k, shape):
        return scale * jax.random.normal(k, shape, dtype=jnp.float32)

    # nn.MultiheadAttention: in_proj_weight (3E, E) split into Wq/Wk/Wv; out_proj (E, E).
    # Stored transposed so the kernel does x @ W.
    return {
        "wq": rnd(ks[0], (E, E)),
        "wk": rnd(ks[1], (E, E)),
        "wv": rnd(ks[2], (E, E)),
        "bq": rnd(ks[3], (1, E)),
        "bk": rnd(ks[4], (1, E)),
        "bv": rnd(ks[5], (1, E)),
        "wo": rnd(ks[6], (E, E)),
        "bo": rnd(ks[7], (1, E)),
        # concat_linear: (2E -> E/2), split into mean-half and std-half of the weight.
        "w1m": rnd(ks[8], (E, E // 2)),
        "w1s": rnd(ks[9], (E, E // 2)),
        "b1": rnd(ks[10], (1, E // 2)),
        # classifier: (E/2 -> output_dim)
        "w2": rnd(ks[11], (E // 2, output_dim)),
        "b2": jnp.zeros((1, output_dim), dtype=jnp.float32),
    }


if __name__ == "__main__":
    # Small shapes consistent with the module (real model: E=768; scaled down here).
    B, S, E = 2, 8, 32
    num_heads = 4
    output_dim = 4

    key = jax.random.PRNGKey(0)
    kx, kp = jax.random.split(key)
    x = jax.random.normal(kx, (B, S, E), dtype=jnp.float32)
    params = make_params(kp, E, output_dim)
    packed = pack_params(params, num_heads=num_heads)   # one-time weight packing

    y, feat = sse_audio_forward(x, packed, num_heads=num_heads)
    jax.block_until_ready((y, feat))

    y_ref, feat_ref = _reference(x, params, num_heads)
    # bf16 matmul operands (f32 accumulate) + approx reciprocal -> loosened tolerance.
    assert jnp.allclose(y, y_ref, atol=2e-2, rtol=2e-2), "y mismatch"
    assert jnp.allclose(feat, feat_ref, atol=2e-2, rtol=2e-2), "feat mismatch"

    print("KERNEL_OK")
</pallas_src>

<mosaic_0001>
module attributes {stable_mosaic.version = 11 : i64} {
  func.func @_sse_audio_kernel(%arg0: i32, %arg1: memref<2x8x32xf32, #tpu.memory_space<vmem>>, %arg2: memref<32x96xbf16, #tpu.memory_space<vmem>>, %arg3: memref<1x96xf32, #tpu.memory_space<vmem>>, %arg4: memref<32x32xbf16, #tpu.memory_space<vmem>>, %arg5: memref<1x32xf32, #tpu.memory_space<vmem>>, %arg6: memref<32x16xbf16, #tpu.memory_space<vmem>>, %arg7: memref<32x16xbf16, #tpu.memory_space<vmem>>, %arg8: memref<1x16xf32, #tpu.memory_space<vmem>>, %arg9: memref<16x4xbf16, #tpu.memory_space<vmem>>, %arg10: memref<1x4xf32, #tpu.memory_space<vmem>>, %arg11: memref<2x4xf32, #tpu.memory_space<vmem>>, %arg12: memref<2x16xf32, #tpu.memory_space<vmem>>) attributes {dimension_semantics = [#tpu.dimension_semantics<parallel>], iteration_bounds = array<i64: 1>, scalar_prefetch = 0 : i64, scratch_operands = 0 : i64, tpu.core_type = #tpu.core_type<tc>, window_params = [{transform_indices = @transform_0, window_bounds = array<i64: 2, 8, 32>}, {pipeline_mode = #tpu.pipeline_mode<synchronous>, transform_indices = @transform_1, window_bounds = array<i64: 32, 96>}, {pipeline_mode = #tpu.pipeline_mode<synchronous>, transform_indices = @transform_2, window_bounds = array<i64: 1, 96>}, {pipeline_mode = #tpu.pipeline_mode<synchronous>, transform_indices = @transform_3, window_bounds = array<i64: 32, 32>}, {pipeline_mode = #tpu.pipeline_mode<synchronous>, transform_indices = @transform_4, window_bounds = array<i64: 1, 32>}, {pipeline_mode = #tpu.pipeline_mode<synchronous>, transform_indices = @transform_5, window_bounds = array<i64: 32, 16>}, {pipeline_mode = #tpu.pipeline_mode<synchronous>, transform_indices = @transform_6, window_bounds = array<i64: 32, 16>}, {pipeline_mode = #tpu.pipeline_mode<synchronous>, transform_indices = @transform_7, window_bounds = array<i64: 1, 16>}, {pipeline_mode = #tpu.pipeline_mode<synchronous>, transform_indices = @transform_8, window_bounds = array<i64: 16, 4>}, {pipeline_mode = #tpu.pipeline_mode<synchronous>, transform_indices = @transform_9, window_bounds = array<i64: 1, 4>}, {transform_indices = @transform_10, window_bounds = array<i64: 2, 4>}, {transform_indices = @transform_11, window_bounds = array<i64: 2, 16>}]} {
    %c0 = arith.constant 0 : index
    %c0_0 = arith.constant 0 : index
    %c0_1 = arith.constant 0 : index
    %0 = vector.load %arg1[%c0, %c0_0, %c0_1] : memref<2x8x32xf32, #tpu.memory_space<vmem>>, vector<2x8x32xf32>
    %1 = arith.truncf %0 : vector<2x8x32xf32> to vector<2x8x32xbf16>
    %2 = vector.shape_cast %1 : vector<2x8x32xbf16> to vector<16x32xbf16>
    %c0_2 = arith.constant 0 : index
    %c0_3 = arith.constant 0 : index
    %3 = vector.load %arg2[%c0_2, %c0_3] : memref<32x96xbf16, #tpu.memory_space<vmem>>, vector<32x96xbf16>
    %cst = arith.constant dense<0.000000e+00> : vector<16x96xf32>
    %4 = tpu.matmul %2, %3, %cst {dimension_numbers = #tpu.dot_dimension_numbers<[1], [0], [0], [1], [0, 0, 1, 1], [], []>} : vector<16x32xbf16>, vector<32x96xbf16>, vector<16x96xf32> -> vector<16x96xf32>
    %c0_4 = arith.constant 0 : index
    %c0_5 = arith.constant 0 : index
    %5 = vector.load %arg3[%c0_4, %c0_5] : memref<1x96xf32, #tpu.memory_space<vmem>>, vector<1x96xf32>
    %6 = vector.broadcast %5 : vector<1x96xf32> to vector<16x96xf32>
    %7 = arith.addf %4, %6 : vector<16x96xf32>
    %8 = arith.truncf %7 : vector<16x96xf32> to vector<16x96xbf16>
    %9 = vector.extract_strided_slice %8 {offsets = [0, 0], sizes = [16, 8], strides = [1, 1]} : vector<16x96xbf16> to vector<16x8xbf16>
    %10 = vector.shape_cast %9 : vector<16x8xbf16> to vector<2x8x8xbf16>
    %11 = vector.extract_strided_slice %8 {offsets = [0, 32], sizes = [16, 8], strides = [1, 1]} : vector<16x96xbf16> to vector<16x8xbf16>
    %12 = vector.shape_cast %11 : vector<16x8xbf16> to vector<2x8x8xbf16>
    %13 = vector.extract_strided_slice %8 {offsets = [0, 64], sizes = [16, 8], strides = [1, 1]} : vector<16x96xbf16> to vector<16x8xbf16>
    %14 = vector.shape_cast %13 : vector<16x8xbf16> to vector<2x8x8xbf16>
    "tpu.trace_start"() <{level = 10 : i32, message = "bqd,bkd->bqk"}> : () -> ()
    %cst_6 = arith.constant dense<0.000000e+00> : vector<2x8x8xf32>
    %15 = tpu.matmul %10, %12, %cst_6 {dimension_numbers = #tpu.dot_dimension_numbers<[2], [2], [1], [1], [0, 0, 0, 1, 1, 1], [0], [0]>} : vector<2x8x8xbf16>, vector<2x8x8xbf16>, vector<2x8x8xf32> -> vector<2x8x8xf32>
    "tpu.trace_stop"() : () -> ()
    %cst_7 = arith.constant dense<0xFF800000> : vector<2x8xf32>
    %16 = vector.multi_reduction <maximumf>, %15, %cst_7 [2] : vector<2x8x8xf32> to vector<2x8xf32>
    %17 = vector.shape_cast %16 : vector<2x8xf32> to vector<2x8x1xf32>
    %18 = vector.broadcast %17 : vector<2x8x1xf32> to vector<2x8x8xf32>
    %19 = arith.subf %15, %18 : vector<2x8x8xf32>
    %20 = math.exp %19 : vector<2x8x8xf32>
    %cst_8 = arith.constant dense<0.000000e+00> : vector<2x8xf32>
    %21 = vector.multi_reduction <add>, %20, %cst_8 [2] : vector<2x8x8xf32> to vector<2x8xf32>
    %22 = vector.shape_cast %21 : vector<2x8xf32> to vector<2x8x1xf32>
    %23 = arith.truncf %20 : vector<2x8x8xf32> to vector<2x8x8xbf16>
    "tpu.trace_start"() <{level = 10 : i32, message = "bqk,bkd->bqd"}> : () -> ()
    %cst_9 = arith.constant dense<0.000000e+00> : vector<2x8x8xf32>
    %24 = tpu.matmul %23, %14, %cst_9 {dimension_numbers = #tpu.dot_dimension_numbers<[2], [1], [1], [2], [0, 0, 0, 1, 1, 2], [0], [0]>} : vector<2x8x8xbf16>, vector<2x8x8xbf16>, vector<2x8x8xf32> -> vector<2x8x8xf32>
    "tpu.trace_stop"() : () -> ()
    %25 = tpu.reciprocal %22 {approx = true} : vector<2x8x1xf32> -> vector<2x8x1xf32>
    %26 = vector.broadcast %25 : vector<2x8x1xf32> to vector<2x8x8xf32>
    %27 = arith.mulf %24, %26 : vector<2x8x8xf32>
    %28 = arith.truncf %27 : vector<2x8x8xf32> to vector<2x8x8xbf16>
    %29 = vector.shape_cast %28 : vector<2x8x8xbf16> to vector<16x8xbf16>
    %30 = vector.extract_strided_slice %8 {offsets = [0, 8], sizes = [16, 8], strides = [1, 1]} : vector<16x96xbf16> to vector<16x8xbf16>
    %31 = vector.shape_cast %30 : vector<16x8xbf16> to vector<2x8x8xbf16>
    %32 = vector.extract_strided_slice %8 {offsets = [0, 40], sizes = [16, 8], strides = [1, 1]} : vector<16x96xbf16> to vector<16x8xbf16>
    %33 = vector.shape_cast %32 : vector<16x8xbf16> to vector<2x8x8xbf16>
    %34 = vector.extract_strided_slice %8 {offsets = [0, 72], sizes = [16, 8], strides = [1, 1]} : vector<16x96xbf16> to vector<16x8xbf16>
    %35 = vector.shape_cast %34 : vector<16x8xbf16> to vector<2x8x8xbf16>
    "tpu.trace_start"() <{level = 10 : i32, message = "bqd,bkd->bqk"}> : () -> ()
    %cst_10 = arith.constant dense<0.000000e+00> : vector<2x8x8xf32>
    %36 = tpu.matmul %31, %33, %cst_10 {dimension_numbers = #tpu.dot_dimension_numbers<[2], [2], [1], [1], [0, 0, 0, 1, 1, 1], [0], [0]>} : vector<2x8x8xbf16>, vector<2x8x8xbf16>, vector<2x8x8xf32> -> vector<2x8x8xf32>
    "tpu.trace_stop"() : () -> ()
    %cst_11 = arith.constant dense<0xFF800000> : vector<2x8xf32>
    %37 = vector.multi_reduction <maximumf>, %36, %cst_11 [2] : vector<2x8x8xf32> to vector<2x8xf32>
    %38 = vector.shape_cast %37 : vector<2x8xf32> to vector<2x8x1xf32>
    %39 = vector.broadcast %38 : vector<2x8x1xf32> to vector<2x8x8xf32>
    %40 = arith.subf %36, %39 : vector<2x8x8xf32>
    %41 = math.exp %40 : vector<2x8x8xf32>
    %cst_12 = arith.constant dense<0.000000e+00> : vector<2x8xf32>
    %42 = vector.multi_reduction <add>, %41, %cst_12 [2] : vector<2x8x8xf32> to vector<2x8xf32>
    %43 = vector.shape_cast %42 : vector<2x8xf32> to vector<2x8x1xf32>
    %44 = arith.truncf %41 : vector<2x8x8xf32> to vector<2x8x8xbf16>
    "tpu.trace_start"() <{level = 10 : i32, message = "bqk,bkd->bqd"}> : () -> ()
    %cst_13 = arith.constant dense<0.000000e+00> : vector<2x8x8xf32>
    %45 = tpu.matmul %44, %35, %cst_13 {dimension_numbers = #tpu.dot_dimension_numbers<[2], [1], [1], [2], [0, 0, 0, 1, 1, 2], [0], [0]>} : vector<2x8x8xbf16>, vector<2x8x8xbf16>, vector<2x8x8xf32> -> vector<2x8x8xf32>
    "tpu.trace_stop"() : () -> ()
    %46 = tpu.reciprocal %43 {approx = true} : vector<2x8x1xf32> -> vector<2x8x1xf32>
    %47 = vector.broadcast %46 : vector<2x8x1xf32> to vector<2x8x8xf32>
    %48 = arith.mulf %45, %47 : vector<2x8x8xf32>
    %49 = arith.truncf %48 : vector<2x8x8xf32> to vector<2x8x8xbf16>
    %50 = vector.shape_cast %49 : vector<2x8x8xbf16> to vector<16x8xbf16>
    %51 = vector.extract_strided_slice %8 {offsets = [0, 16], sizes = [16, 8], strides = [1, 1]} : vector<16x96xbf16> to vector<16x8xbf16>
    %52 = vector.shape_cast %51 : vector<16x8xbf16> to vector<2x8x8xbf16>
    %53 = vector.extract_strided_slice %8 {offsets = [0, 48], sizes = [16, 8], strides = [1, 1]} : vector<16x96xbf16> to vector<16x8xbf16>
    %54 = vector.shape_cast %53 : vector<16x8xbf16> to vector<2x8x8xbf16>
    %55 = vector.extract_strided_slice %8 {offsets = [0, 80], sizes = [16, 8], strides = [1, 1]} : vector<16x96xbf16> to vector<16x8xbf16>
    %56 = vector.shape_cast %55 : vector<16x8xbf16> to vector<2x8x8xbf16>
    "tpu.trace_start"() <{level = 10 : i32, message = "bqd,bkd->bqk"}> : () -> ()
    %cst_14 = arith.constant dense<0.000000e+00> : vector<2x8x8xf32>
    %57 = tpu.matmul %52, %54, %cst_14 {dimension_numbers = #tpu.dot_dimension_numbers<[2], [2], [1], [1], [0, 0, 0, 1, 1, 1], [0], [0]>} : vector<2x8x8xbf16>, vector<2x8x8xbf16>, vector<2x8x8xf32> -> vector<2x8x8xf32>
    "tpu.trace_stop"() : () -> ()
    %cst_15 = arith.constant dense<0xFF800000> : vector<2x8xf32>
    %58 = vector.multi_reduction <maximumf>, %57, %cst_15 [2] : vector<2x8x8xf32> to vector<2x8xf32>
    %59 = vector.shape_cast %58 : vector<2x8xf32> to vector<2x8x1xf32>
    %60 = vector.broadcast %59 : vector<2x8x1xf32> to vector<2x8x8xf32>
    %61 = arith.subf %57, %60 : vector<2x8x8xf32>
    %62 = math.exp %61 : vector<2x8x8xf32>
    %cst_16 = arith.constant dense<0.000000e+00> : vector<2x8xf32>
    %63 = vector.multi_reduction <add>, %62, %cst_16 [2] : vector<2x8x8xf32> to vector<2x8xf32>
    %64 = vector.shape_cast %63 : vector<2x8xf32> to vector<2x8x1xf32>
    %65 = arith.truncf %62 : vector<2x8x8xf32> to vector<2x8x8xbf16>
    "tpu.trace_start"() <{level = 10 : i32, message = "bqk,bkd->bqd"}> : () -> ()
    %cst_17 = arith.constant dense<0.000000e+00> : vector<2x8x8xf32>
    %66 = tpu.matmul %65, %56, %cst_17 {dimension_numbers = #tpu.dot_dimension_numbers<[2], [1], [1], [2], [0, 0, 0, 1, 1, 2], [0], [0]>} : vector<2x8x8xbf16>, vector<2x8x8xbf16>, vector<2x8x8xf32> -> vector<2x8x8xf32>
    "tpu.trace_stop"() : () -> ()
    %67 = tpu.reciprocal %64 {approx = true} : vector<2x8x1xf32> -> vector<2x8x1xf32>
    %68 = vector.broadcast %67 : vector<2x8x1xf32> to vector<2x8x8xf32>
    %69 = arith.mulf %66, %68 : vector<2x8x8xf32>
    %70 = arith.truncf %69 : vector<2x8x8xf32> to vector<2x8x8xbf16>
    %71 = vector.shape_cast %70 : vector<2x8x8xbf16> to vector<16x8xbf16>
    %72 = vector.extract_strided_slice %8 {offsets = [0, 24], sizes = [16, 8], strides = [1, 1]} : vector<16x96xbf16> to vector<16x8xbf16>
    %73 = vector.shape_cast %72 : vector<16x8xbf16> to vector<2x8x8xbf16>
    %74 = vector.extract_strided_slice %8 {offsets = [0, 56], sizes = [16, 8], strides = [1, 1]} : vector<16x96xbf16> to vector<16x8xbf16>
    %75 = vector.shape_cast %74 : vector<16x8xbf16> to vector<2x8x8xbf16>
    %76 = vector.extract_strided_slice %8 {offsets = [0, 88], sizes = [16, 8], strides = [1, 1]} : vector<16x96xbf16> to vector<16x8xbf16>
    %77 = vector.shape_cast %76 : vector<16x8xbf16> to vector<2x8x8xbf16>
    "tpu.trace_start"() <{level = 10 : i32, message = "bqd,bkd->bqk"}> : () -> ()
    %cst_18 = arith.constant dense<0.000000e+00> : vector<2x8x8xf32>
    %78 = tpu.matmul %73, %75, %cst_18 {dimension_numbers = #tpu.dot_dimension_numbers<[2], [2], [1], [1], [0, 0, 0, 1, 1, 1], [0], [0]>} : vector<2x8x8xbf16>, vector<2x8x8xbf16>, vector<2x8x8xf32> -> vector<2x8x8xf32>
    "tpu.trace_stop"() : () -> ()
    %cst_19 = arith.constant dense<0xFF800000> : vector<2x8xf32>
    %79 = vector.multi_reduction <maximumf>, %78, %cst_19 [2] : vector<2x8x8xf32> to vector<2x8xf32>
    %80 = vector.shape_cast %79 : vector<2x8xf32> to vector<2x8x1xf32>
    %81 = vector.broadcast %80 : vector<2x8x1xf32> to vector<2x8x8xf32>
    %82 = arith.subf %78, %81 : vector<2x8x8xf32>
    %83 = math.exp %82 : vector<2x8x8xf32>
    %cst_20 = arith.constant dense<0.000000e+00> : vector<2x8xf32>
    %84 = vector.multi_reduction <add>, %83, %cst_20 [2] : vector<2x8x8xf32> to vector<2x8xf32>
    %85 = vector.shape_cast %84 : vector<2x8xf32> to vector<2x8x1xf32>
    %86 = arith.truncf %83 : vector<2x8x8xf32> to vector<2x8x8xbf16>
    "tpu.trace_start"() <{level = 10 : i32, message = "bqk,bkd->bqd"}> : () -> ()
    %cst_21 = arith.constant dense<0.000000e+00> : vector<2x8x8xf32>
    %87 = tpu.matmul %86, %77, %cst_21 {dimension_numbers = #tpu.dot_dimension_numbers<[2], [1], [1], [2], [0, 0, 0, 1, 1, 2], [0], [0]>} : vector<2x8x8xbf16>, vector<2x8x8xbf16>, vector<2x8x8xf32> -> vector<2x8x8xf32>
    "tpu.trace_stop"() : () -> ()
    %88 = tpu.reciprocal %85 {approx = true} : vector<2x8x1xf32> -> vector<2x8x1xf32>
    %89 = vector.broadcast %88 : vector<2x8x1xf32> to vector<2x8x8xf32>
    %90 = arith.mulf %87, %89 : vector<2x8x8xf32>
    %91 = arith.truncf %90 : vector<2x8x8xf32> to vector<2x8x8xbf16>
    %92 = vector.shape_cast %91 : vector<2x8x8xbf16> to vector<16x8xbf16>
    %93 = tpu.concatenate %29, %50, %71, %92 in 1 : vector<16x8xbf16>, vector<16x8xbf16>, vector<16x8xbf16>, vector<16x8xbf16> -> vector<16x32xbf16>
    %c0_22 = arith.constant 0 : index
    %c0_23 = arith.constant 0 : index
    %94 = vector.load %arg4[%c0_22, %c0_23] : memref<32x32xbf16, #tpu.memory_space<vmem>>, vector<32x32xbf16>
    %cst_24 = arith.constant dense<0.000000e+00> : vector<16x32xf32>
    %95 = tpu.matmul %93, %94, %cst_24 {dimension_numbers = #tpu.dot_dimension_numbers<[1], [0], [0], [1], [0, 0, 1, 1], [], []>} : vector<16x32xbf16>, vector<32x32xbf16>, vector<16x32xf32> -> vector<16x32xf32>
    %c0_25 = arith.constant 0 : index
    %c0_26 = arith.constant 0 : index
    %96 = vector.load %arg5[%c0_25, %c0_26] : memref<1x32xf32, #tpu.memory_space<vmem>>, vector<1x32xf32>
    %97 = vector.broadcast %96 : vector<1x32xf32> to vector<16x32xf32>
    %98 = arith.addf %95, %97 : vector<16x32xf32>
    %99 = vector.shape_cast %98 : vector<16x32xf32> to vector<2x8x32xf32>
    %cst_27 = arith.constant dense<0.000000e+00> : vector<2x32xf32>
    %100 = vector.multi_reduction <add>, %99, %cst_27 [1] : vector<2x8x32xf32> to vector<2x32xf32>
    %cst_28 = arith.constant 8.000000e+00 : f32
    %101 = vector.broadcast %cst_28 : f32 to vector<2x32xf32>
    %102 = arith.divf %100, %101 : vector<2x32xf32>
    %103 = vector.shape_cast %102 : vector<2x32xf32> to vector<2x1x32xf32>
    %104 = vector.broadcast %103 : vector<2x1x32xf32> to vector<2x8x32xf32>
    %105 = arith.subf %99, %104 : vector<2x8x32xf32>
    %106 = arith.mulf %105, %105 : vector<2x8x32xf32>
    %cst_29 = arith.constant dense<0.000000e+00> : vector<2x32xf32>
    %107 = vector.multi_reduction <add>, %106, %cst_29 [1] : vector<2x8x32xf32> to vector<2x32xf32>
    %cst_30 = arith.constant 0.142857149 : f32
    %108 = vector.broadcast %cst_30 : f32 to vector<2x32xf32>
    %109 = arith.mulf %107, %108 : vector<2x32xf32>
    %110 = math.sqrt %109 : vector<2x32xf32>
    %111 = arith.truncf %102 : vector<2x32xf32> to vector<2x32xbf16>
    %c0_31 = arith.constant 0 : index
    %c0_32 = arith.constant 0 : index
    %112 = vector.load %arg6[%c0_31, %c0_32] : memref<32x16xbf16, #tpu.memory_space<vmem>>, vector<32x16xbf16>
    %cst_33 = arith.constant dense<0.000000e+00> : vector<2x16xf32>
    %113 = tpu.matmul %111, %112, %cst_33 {dimension_numbers = #tpu.dot_dimension_numbers<[1], [0], [0], [1], [0, 0, 1, 1], [], []>} : vector<2x32xbf16>, vector<32x16xbf16>, vector<2x16xf32> -> vector<2x16xf32>
    %114 = arith.truncf %110 : vector<2x32xf32> to vector<2x32xbf16>
    %c0_34 = arith.constant 0 : index
    %c0_35 = arith.constant 0 : index
    %115 = vector.load %arg7[%c0_34, %c0_35] : memref<32x16xbf16, #tpu.memory_space<vmem>>, vector<32x16xbf16>
    %cst_36 = arith.constant dense<0.000000e+00> : vector<2x16xf32>
    %116 = tpu.matmul %114, %115, %cst_36 {dimension_numbers = #tpu.dot_dimension_numbers<[1], [0], [0], [1], [0, 0, 1, 1], [], []>} : vector<2x32xbf16>, vector<32x16xbf16>, vector<2x16xf32> -> vector<2x16xf32>
    %117 = arith.addf %113, %116 : vector<2x16xf32>
    %c0_37 = arith.constant 0 : index
    %c0_38 = arith.constant 0 : index
    %118 = vector.load %arg8[%c0_37, %c0_38] : memref<1x16xf32, #tpu.memory_space<vmem>>, vector<1x16xf32>
    %119 = vector.broadcast %118 : vector<1x16xf32> to vector<2x16xf32>
    %120 = arith.addf %117, %119 : vector<2x16xf32>
    %121 = arith.truncf %120 : vector<2x16xf32> to vector<2x16xbf16>
    %c0_39 = arith.constant 0 : index
    %c0_40 = arith.constant 0 : index
    %122 = vector.load %arg9[%c0_39, %c0_40] : memref<16x4xbf16, #tpu.memory_space<vmem>>, vector<16x4xbf16>
    %cst_41 = arith.constant dense<0.000000e+00> : vector<2x4xf32>
    %123 = tpu.matmul %121, %122, %cst_41 {dimension_numbers = #tpu.dot_dimension_numbers<[1], [0], [0], [1], [0, 0, 1, 1], [], []>} : vector<2x16xbf16>, vector<16x4xbf16>, vector<2x4xf32> -> vector<2x4xf32>
    %c0_42 = arith.constant 0 : index
    %c0_43 = arith.constant 0 : index
    %124 = vector.load %arg10[%c0_42, %c0_43] : memref<1x4xf32, #tpu.memory_space<vmem>>, vector<1x4xf32>
    %125 = vector.broadcast %124 : vector<1x4xf32> to vector<2x4xf32>
    %126 = arith.addf %123, %125 : vector<2x4xf32>
    %c0_44 = arith.constant 0 : index
    %c0_45 = arith.constant 0 : index
    %127 = vector.load %arg12[%c0_44, %c0_45] : memref<2x16xf32, #tpu.memory_space<vmem>>, vector<2x16xf32>
    tpu.vector_store %arg12[%c0_44, %c0_45], %120 {strides = array<i32>} : memref<2x16xf32, #tpu.memory_space<vmem>>, vector<2x16xf32>,
    %c0_46 = arith.constant 0 : index
    %c0_47 = arith.constant 0 : index
    %128 = vector.load %arg11[%c0_46, %c0_47] : memref<2x4xf32, #tpu.memory_space<vmem>>, vector<2x4xf32>
    tpu.vector_store %arg11[%c0_46, %c0_47], %126 {strides = array<i32>} : memref<2x4xf32, #tpu.memory_space<vmem>>, vector<2x4xf32>,
    return
  }
  func.func @transform_0(%arg0: i32) -> (i32, i32, i32) {
    %c0_i32 = arith.constant 0 : i32
    %c0_i32_0 = arith.constant 0 : i32
    %c0_i32_1 = arith.constant 0 : i32
    return %arg0, %c0_i32, %c0_i32_0 : i32, i32, i32
  }
  func.func @transform_1(%arg0: i32) -> (i32, i32) {
    %c0_i32 = arith.constant 0 : i32
    %c0_i32_0 = arith.constant 0 : i32
    %c0_i32_1 = arith.constant 0 : i32
    return %c0_i32, %c0_i32_0 : i32, i32
  }
  func.func @transform_2(%arg0: i32) -> (i32, i32) {
    %c0_i32 = arith.constant 0 : i32
    %c0_i32_0 = arith.constant 0 : i32
    %c0_i32_1 = arith.constant 0 : i32
    return %c0_i32, %c0_i32_0 : i32, i32
  }
  func.func @transform_3(%arg0: i32) -> (i32, i32) {
    %c0_i32 = arith.constant 0 : i32
    %c0_i32_0 = arith.constant 0 : i32
    %c0_i32_1 = arith.constant 0 : i32
    return %c0_i32, %c0_i32_0 : i32, i32
  }
  func.func @transform_4(%arg0: i32) -> (i32, i32) {
    %c0_i32 = arith.constant 0 : i32
    %c0_i32_0 = arith.constant 0 : i32
    %c0_i32_1 = arith.constant 0 : i32
    return %c0_i32, %c0_i32_0 : i32, i32
  }
  func.func @transform_5(%arg0: i32) -> (i32, i32) {
    %c0_i32 = arith.constant 0 : i32
    %c0_i32_0 = arith.constant 0 : i32
    %c0_i32_1 = arith.constant 0 : i32
    return %c0_i32, %c0_i32_0 : i32, i32
  }
  func.func @transform_6(%arg0: i32) -> (i32, i32) {
    %c0_i32 = arith.constant 0 : i32
    %c0_i32_0 = arith.constant 0 : i32
    %c0_i32_1 = arith.constant 0 : i32
    return %c0_i32, %c0_i32_0 : i32, i32
  }
  func.func @transform_7(%arg0: i32) -> (i32, i32) {
    %c0_i32 = arith.constant 0 : i32
    %c0_i32_0 = arith.constant 0 : i32
    %c0_i32_1 = arith.constant 0 : i32
    return %c0_i32, %c0_i32_0 : i32, i32
  }
  func.func @transform_8(%arg0: i32) -> (i32, i32) {
    %c0_i32 = arith.constant 0 : i32
    %c0_i32_0 = arith.constant 0 : i32
    %c0_i32_1 = arith.constant 0 : i32
    return %c0_i32, %c0_i32_0 : i32, i32
  }
  func.func @transform_9(%arg0: i32) -> (i32, i32) {
    %c0_i32 = arith.constant 0 : i32
    %c0_i32_0 = arith.constant 0 : i32
    %c0_i32_1 = arith.constant 0 : i32
    return %c0_i32, %c0_i32_0 : i32, i32
  }
  func.func @transform_10(%arg0: i32) -> (i32, i32) {
    %c0_i32 = arith.constant 0 : i32
    %c0_i32_0 = arith.constant 0 : i32
    return %arg0, %c0_i32 : i32, i32
  }
  func.func @transform_11(%arg0: i32) -> (i32, i32) {
    %c0_i32 = arith.constant 0 : i32
    %c0_i32_0 = arith.constant 0 : i32
    return %arg0, %c0_i32 : i32, i32
  }
}

</mosaic_0001>

<llo_original>
// kernel: tpu_custom_call.1
$region0: #{tpu_custom_call.1}
  #allocation0 [shape = 'u32[]', space=smem, size = 0x4, offset = 0x4, fixed_abs, tag = 'smem constant byte address 0x4 - core index']
  #allocation1 [shape = 'u32[72,128]{1,0:T(1,128)}', space=vmem, size = 0x9000, scoped, tag = 'internal scratch']
  %s0 = inlined_call_operand.vmem [shape: f32[2,8,32], index: 0, kind: input, shape index: {}]
  %s1 = inlined_call_operand.vmem [shape: bf16[32,96], index: 1, kind: input, shape index: {}]
  %s2 = inlined_call_operand.vmem [shape: f32[1,96], index: 2, kind: input, shape index: {}]
  %s3 = inlined_call_operand.hbm [shape: bf16[32,32], index: 3, kind: input, shape index: {}]
  %s4 = inlined_call_operand.vmem [shape: f32[1,32], index: 4, kind: input, shape index: {}]
  %s5 = inlined_call_operand.vmem [shape: bf16[32,16], index: 5, kind: input, shape index: {}]
  %s6 = inlined_call_operand.vmem [shape: bf16[32,16], index: 6, kind: input, shape index: {}]
  %s7 = inlined_call_operand.vmem [shape: f32[1,16], index: 7, kind: input, shape index: {}]
  %s8 = inlined_call_operand.vmem [shape: bf16[16,4], index: 8, kind: input, shape index: {}]
  %s9 = inlined_call_operand.vmem [shape: f32[1,4], index: 9, kind: input, shape index: {}]
  %s10 = inlined_call_operand.hbm [shape: f32[2,4], index: 10, kind: output, shape index: {0}]
  %s11 = inlined_call_operand.hbm [shape: f32[2,16], index: 11, kind: output, shape index: {1}]
  %12 = xla_tuple %s10, %s11
  %s13 = sld [smem:[#allocation0]]
  $region62: #{tpu_custom_call.1} parent=0
    _
  %s15 = ssub.s32 1, %s13
  %s16 = scalar_select 0, %s15, %s13
  $region1: #{tpu_custom_call.1} parent=0
    #allocation2 [shape = 'u8[8192]{0}', space=vmem, size = 0x2000, scoped, tag = 'input window, operand 3, single buffered']
    #allocation3 [shape = 's32[1]{0}', space=sflag, size = 0x4, scoped, tag = 'scoped memory for tpu_custom_call.1']
    #allocation4 [shape = 's32[1]{0}', space=sflag, size = 0x4, scoped, tag = 'scoped memory for tpu_custom_call.1']
    #allocation5 [shape = 'u8[1024]{0}', space=vmem, size = 0x400, scoped, tag = 'output window, operand 0, single buffered']
    #allocation6 [shape = 'u8[1024]{0}', space=vmem, size = 0x400, scoped, tag = 'output window, operand 1, single buffered']
    #allocation7 [shape = 's32[1]{0}', space=sflag, size = 0x4, scoped, tag = 'scoped memory for tpu_custom_call.1']
    %17 = vsyncpa [#allocation3], 0
    %18 = vsyncpa [#allocation4], 0
    %19 = vsyncpa [#allocation7], 0
    // Predicated region
    $region2: #{tpu_custom_call.1} parent=1 // pred_check
      _
    $region3: #{tpu_custom_call.1} parent=1 // pred_check_branch
      %21 = sbr.rel (0) target = $region5
    $region4: #{tpu_custom_call.1} parent=1 // pred_region
      _
    $region5: #{tpu_custom_call.1} parent=1 // pred_fallthru
      _
    // Predicated region
    $region6: #{tpu_custom_call.1} parent=1 // pred_check
      _
    $region7: #{tpu_custom_call.1} parent=1 // pred_check_branch
      %23 = sbr.rel (0) target = $region9
    $region8: #{tpu_custom_call.1} parent=1 // pred_region
      _
    $region9: #{tpu_custom_call.1} parent=1 // pred_fallthru
      _
    // Predicated region
    $region10: #{tpu_custom_call.1} parent=1 // pred_check
      _
    $region11: #{tpu_custom_call.1} parent=1 // pred_check_branch
      %25 = sbr.rel (0) target = $region13
    $region12: #{tpu_custom_call.1} parent=1 // pred_region
      _
    $region13: #{tpu_custom_call.1} parent=1 // pred_fallthru
      _
    // Predicated region
    $region14: #{tpu_custom_call.1} parent=1 // pred_check
      _
    $region15: #{tpu_custom_call.1} parent=1 // pred_check_branch
      %27 = sbr.rel (0) target = $region17
    $region16: #{tpu_custom_call.1} parent=1 // pred_region
      %29 = vsyncadd [#allocation3], 0
      %s30 = sshll.u32 %s3, 4
      %s31 = int_to_ptr.hbm [resolvable:$true] %s30
      %s32 = sshll.u32 [#allocation2], 4
      %s33 = int_to_ptr.vmem [resolvable:$true] %s32
      %38 = dma.hbm_to_vmem [thread:$0]  %s31, 256, %s33, [#allocation3], 64, 64, 4
    $region17: #{tpu_custom_call.1} parent=1 // pred_fallthru
      _
    // Predicated region
    $region18: #{tpu_custom_call.1} parent=1 // pred_check
      _
    $region19: #{tpu_custom_call.1} parent=1 // pred_check_branch
      %40 = sbr.rel (0) target = $region21
    $region20: #{tpu_custom_call.1} parent=1 // pred_region
      _
    $region21: #{tpu_custom_call.1} parent=1 // pred_fallthru
      _
    // Predicated region
    $region22: #{tpu_custom_call.1} parent=1 // pred_check
      _
    $region23: #{tpu_custom_call.1} parent=1 // pred_check_branch
      %42 = sbr.rel (0) target = $region25
    $region24: #{tpu_custom_call.1} parent=1 // pred_region
      _
    $region25: #{tpu_custom_call.1} parent=1 // pred_fallthru
      _
    // Predicated region
    $region26: #{tpu_custom_call.1} parent=1 // pred_check
      _
    $region27: #{tpu_custom_call.1} parent=1 // pred_check_branch
      %44 = sbr.rel (0) target = $region29
    $region28: #{tpu_custom_call.1} parent=1 // pred_region
      _
    $region29: #{tpu_custom_call.1} parent=1 // pred_fallthru
      _
    // Predicated region
    $region30: #{tpu_custom_call.1} parent=1 // pred_check
      _
    $region31: #{tpu_custom_call.1} parent=1 // pred_check_branch
      %46 = sbr.rel (0) target = $region33
    $region32: #{tpu_custom_call.1} parent=1 // pred_region
      _
    $region33: #{tpu_custom_call.1} parent=1 // pred_fallthru
      _
    // Predicated region
    $region34: #{tpu_custom_call.1} parent=1 // pred_check
      _
    $region35: #{tpu_custom_call.1} parent=1 // pred_check_branch
      %48 = sbr.rel (0) target = $region37
    $region36: #{tpu_custom_call.1} parent=1 // pred_region
      _
    $region37: #{tpu_custom_call.1} parent=1 // pred_fallthru
      _
    // Predicated region
    $region38: #{tpu_custom_call.1} parent=1 // pred_check
      _
    $region39: #{tpu_custom_call.1} parent=1 // pred_check_branch
      %50 = sbr.rel (0) target = $region41
    $region40: #{tpu_custom_call.1} parent=1 // pred_region
      _
    $region41: #{tpu_custom_call.1} parent=1 // pred_fallthru
      _
    // Predicated region
    $region42: #{tpu_custom_call.1} parent=1 // pred_check
      _
    $region43: #{tpu_custom_call.1} parent=1 // pred_check_branch
      %52 = sbr.rel (0) target = $region45
    $region44: #{tpu_custom_call.1} parent=1 // pred_region
      %54 = dma.done [#allocation3], 256
    $region45: #{tpu_custom_call.1} parent=1 // pred_fallthru
      _
    %v56 = vld [vmem:[%s0] sm:$0xff]
    %v57 = vld [vmem:[%s0 + $0x8] sm:$0xff]
    %v58 = vpack.c.bf16 %v56, %v56
    %v59 = vpack.c.bf16 %v57, %v57
    %v60 = vld [vmem:[%s1] sm:$0xf]
    %v61 = vld [vmem:[%s1 + $0x4] sm:$0xf]
    %v62 = vld [vmem:[%s1 + $0x8] sm:$0xf]
    %v63 = vld [vmem:[%s1 + $0xc] sm:$0xf]
    %v64 = vld [vmem:[%s2] sm:$0x1]
    %v66 = vperm.slane %v64, 0
    %v70 = vunpack.c.l.b16 %v58
    %v71 = vunpack.c.l.b16 %v59
    %v72 = vpack.c.b16 %v71, %v70
    %v77 = vunpack.c.l.b16 %v60
    %v78 = vunpack.c.l.b16 %v61
    %v79 = vunpack.c.l.b16 %v62
    %v80 = vunpack.c.l.b16 %v63
    %v81 = vpack.c.b16 %v78, %v77
    %v82 = vpack.c.b16 %v80, %v79
    %vm85 = vcmask 261120
    %v87 = vsel %vm85, %v72, 0
    %89 = vmatpush.bf16.msra.mxu0 0
    %90 = vmatpush.bf16.msra.mxu0 0
    %91 = vmatpush.bf16.msra.mxu0 0
    %92 = vmatpush.bf16.msra.mxu0 0
    %93 = vmatpush.bf16.msra.mxu0 0
    %94 = vmatpush.bf16.msra.mxu0 0
    %95 = vmatpush.bf16.msra.mxu0 %v82
    %96 = vmatpush.bf16.msra.mxu0 %v81
    %97 = vmatmul.bf16.gmra.mxu0 %v87
    %v98 = vpop.f32.mrf.mxu0
    %v99 = vadd.f32 %v66, %v98
    %v100 = vpop.f32.mrf.mxu0
    %v101 = vadd.f32 %v66, %v100
    %102 = vdwg.mxu0
    %v103 = vpack.c.bf16 %v99, %v99
    %v104 = vpack.c.bf16 %v101, %v101
    %v106 = vunpack.c.l.b16 %v103
    %v107 = vpack.c.b16 %v106, %v106
    %108 = vrot.lane.b32.xlu0 %v107, 96
    %v109 = vpop.permute.xlu0 %108
    %vm110 = vcmask 64512
    %v112 = vsel %vm110, %v103, 0
    %v115 = vsel %vm110, %v109, 0
    %117 = vmatpush.bf16.xpose.msra.mxu0 0
    %118 = vmatpush.bf16.xpose.msra.mxu0 0
    %119 = vmatpush.bf16.xpose.msra.mxu0 0
    %120 = vmatpush.bf16.xpose.msra.mxu0 0
    %121 = vmatpush.bf16.xpose.msra.mxu0 0
    %122 = vmatpush.bf16.xpose.msra.mxu0 0
    %123 = vmatpush.bf16.xpose.msra.mxu0 0
    %124 = vmatpush.bf16.xpose.msra.mxu0 %v115
    %125 = vmatmul.bf16.gmra.mxu0 %v112
    %v126 = vpop.f32.mrf.mxu0
    %v127 = vadd.f32 0.0, %v126
    %v128 = vpop.f32.mrf.mxu0
    %129 = vdwg.mxu0
    %v131 = vunpack.c.l.b16 %v104
    %v132 = vpack.c.b16 %v131, %v131
    %133 = vrot.lane.b32.xlu0 %v132, 96
    %v134 = vpop.permute.xlu0 %133
    %v136 = vsel %vm110, %v104, 0
    %v139 = vsel %vm110, %v134, 0
    %141 = vmatpush.bf16.xpose.msra.mxu0 0
    %142 = vmatpush.bf16.xpose.msra.mxu0 0
    %143 = vmatpush.bf16.xpose.msra.mxu0 0
    %144 = vmatpush.bf16.xpose.msra.mxu0 0
    %145 = vmatpush.bf16.xpose.msra.mxu0 0
    %146 = vmatpush.bf16.xpose.msra.mxu0 0
    %147 = vmatpush.bf16.xpose.msra.mxu0 0
    %148 = vmatpush.bf16.xpose.msra.mxu0 %v139
    %149 = vmatmul.bf16.gmra.mxu0 %v136
    %v150 = vpop.f32.mrf.mxu0
    %v151 = vadd.f32 0.0, %v150
    %v152 = vpop.f32.mrf.mxu0
    %153 = vdwg.mxu0
    %v154 = vsel %vm110, %v127, -inf
    %155 = vmax.xlane.f32.xlu0 %v154
    %v156 = vpop.xlane.xlu0 %155
    %v157 = vsel %vm110, %v151, -inf
    %158 = vmax.xlane.f32.xlu0 %v157
    %v159 = vpop.xlane.xlu0 %158
    %v160 = vsub.f32 %v127, %v156
    %v161 = vsub.f32 %v151, %v159
    %v162 = vmul.f32 %v160, 1.442695
    %v163 = vpow.pop %v162
    %v164 = vmul.f32 %v161, 1.442695
    %v165 = vpow.pop %v164
    %v166 = vsel %vm110, %v163, 0.0
    %167 = vadd.xlane.f32.xlu0 %v166
    %v168 = vpop.xlane.xlu0 %167
    %v169 = vsel %vm110, %v165, 0.0
    %170 = vadd.xlane.f32.xlu0 %v169
    %v171 = vpop.xlane.xlu0 %170
    %v172 = vpack.c.bf16 %v163, %v163
    %v173 = vpack.c.bf16 %v165, %v165
    %174 = vrot.lane.b32.xlu0 %v107, 64
    %v175 = vpop.permute.xlu0 %174
    %v177 = vsel %vm110, %v172, 0
    %vm179 = vcmask 1043456
    %v181 = vsel %vm179, %v175, 0
    %183 = vmatpush.bf16.msra.mxu0 0
    %184 = vmatpush.bf16.msra.mxu0 0
    %185 = vmatpush.bf16.msra.mxu0 0
    %186 = vmatpush.bf16.msra.mxu0 0
    %187 = vmatpush.bf16.msra.mxu0 0
    %188 = vmatpush.bf16.msra.mxu0 0
    %189 = vmatpush.bf16.msra.mxu0 0
    %190 = vmatpush.bf16.msra.mxu0 %v181
    %191 = vmatmul.bf16.gmra.mxu0 %v177
    %v192 = vpop.f32.mrf.mxu0
    %v193 = vadd.f32 0.0, %v192
    %v194 = vpop.f32.mrf.mxu0
    %195 = vdwg.mxu0
    %196 = vrot.lane.b32.xlu0 %v132, 64
    %v197 = vpop.permute.xlu0 %196
    %v199 = vsel %vm110, %v173, 0
    %v202 = vsel %vm179, %v197, 0
    %204 = vmatpush.bf16.msra.mxu0 0
    %205 = vmatpush.bf16.msra.mxu0 0
    %206 = vmatpush.bf16.msra.mxu0 0
    %207 = vmatpush.bf16.msra.mxu0 0
    %208 = vmatpush.bf16.msra.mxu0 0
    %209 = vmatpush.bf16.msra.mxu0 0
    %210 = vmatpush.bf16.msra.mxu0 0
    %211 = vmatpush.bf16.msra.mxu0 %v202
    %212 = vmatmul.bf16.gmra.mxu0 %v199
    %v213 = vpop.f32.mrf.mxu0
    %v214 = vadd.f32 0.0, %v213
    %v215 = vpop.f32.mrf.mxu0
    %216 = vdwg.mxu0
    %v217 = vrcp.pop %v168
    %v218 = vrcp.pop %v171
    %v219 = vmul.f32 %v193, %v217
    %v220 = vmul.f32 %v214, %v218
    %v221 = vpack.c.bf16 %v219, %v219
    %v222 = vpack.c.bf16 %v220, %v220
    %223 = vrot.lane.b32.xlu0 %v107, 120
    %v224 = vpop.permute.xlu0 %223
    %225 = vrot.lane.b32.xlu0 %v107, 88
    %v226 = vpop.permute.xlu0 %225
    %v228 = vsel %vm110, %v224, 0
    %v231 = vsel %vm110, %v226, 0
    %233 = vmatpush.bf16.xpose.msra.mxu0 0
    %234 = vmatpush.bf16.xpose.msra.mxu0 0
    %235 = vmatpush.bf16.xpose.msra.mxu0 0
    %236 = vmatpush.bf16.xpose.msra.mxu0 0
    %237 = vmatpush.bf16.xpose.msra.mxu0 0
    %238 = vmatpush.bf16.xpose.msra.mxu0 0
    %239 = vmatpush.bf16.xpose.msra.mxu0 0
    %240 = vmatpush.bf16.xpose.msra.mxu0 %v231
    %241 = vmatmul.bf16.gmra.mxu0 %v228
    %v242 = vpop.f32.mrf.mxu0
    %v243 = vadd.f32 0.0, %v242
    %v244 = vpop.f32.mrf.mxu0
    %245 = vdwg.mxu0
    %246 = vrot.lane.b32.xlu0 %v132, 120
    %v247 = vpop.permute.xlu0 %246
    %248 = vrot.lane.b32.xlu0 %v132, 88
    %v249 = vpop.permute.xlu0 %248
    %v251 = vsel %vm110, %v247, 0
    %v254 = vsel %vm110, %v249, 0
    %256 = vmatpush.bf16.xpose.msra.mxu0 0
    %257 = vmatpush.bf16.xpose.msra.mxu0 0
    %258 = vmatpush.bf16.xpose.msra.mxu0 0
    %259 = vmatpush.bf16.xpose.msra.mxu0 0
    %260 = vmatpush.bf16.xpose.msra.mxu0 0
    %261 = vmatpush.bf16.xpose.msra.mxu0 0
    %262 = vmatpush.bf16.xpose.msra.mxu0 0
    %263 = vmatpush.bf16.xpose.msra.mxu0 %v254
    %264 = vmatmul.bf16.gmra.mxu0 %v251
    %v265 = vpop.f32.mrf.mxu0
    %v266 = vadd.f32 0.0, %v265
    %v267 = vpop.f32.mrf.mxu0
    %268 = vdwg.mxu0
    %v269 = vsel %vm110, %v243, -inf
    %270 = vmax.xlane.f32.xlu0 %v269
    %v271 = vpop.xlane.xlu0 %270
    %v272 = vsel %vm110, %v266, -inf
    %273 = vmax.xlane.f32.xlu0 %v272
    %v274 = vpop.xlane.xlu0 %273
    %v275 = vsub.f32 %v243, %v271
    %v276 = vsub.f32 %v266, %v274
    %v277 = vmul.f32 %v275, 1.442695
    %v278 = vpow.pop %v277
    %v279 = vmul.f32 %v276, 1.442695
    %v280 = vpow.pop %v279
    %v281 = vsel %vm110, %v278, 0.0
    %282 = vadd.xlane.f32.xlu0 %v281
    %v283 = vpop.xlane.xlu0 %282
    %v284 = vsel %vm110, %v280, 0.0
    %285 = vadd.xlane.f32.xlu0 %v284
    %v286 = vpop.xlane.xlu0 %285
    %v287 = vpack.c.bf16 %v278, %v278
    %v288 = vpack.c.bf16 %v280, %v280
    %289 = vrot.lane.b32.xlu0 %v107, 56
    %v290 = vpop.permute.xlu0 %289
    %v292 = vsel %vm110, %v287, 0
    %v295 = vsel %vm179, %v290, 0
    %297 = vmatpush.bf16.msra.mxu0 0
    %298 = vmatpush.bf16.msra.mxu0 0
    %299 = vmatpush.bf16.msra.mxu0 0
    %300 = vmatpush.bf16.msra.mxu0 0
    %301 = vmatpush.bf16.msra.mxu0 0
    %302 = vmatpush.bf16.msra.mxu0 0
    %303 = vmatpush.bf16.msra.mxu0 0
    %304 = vmatpush.bf16.msra.mxu0 %v295
    %305 = vmatmul.bf16.gmra.mxu0 %v292
    %v306 = vpop.f32.mrf.mxu0
    %v307 = vadd.f32 0.0, %v306
    %v308 = vpop.f32.mrf.mxu0
    %309 = vdwg.mxu0
    %310 = vrot.lane.b32.xlu0 %v132, 56
    %v311 = vpop.permute.xlu0 %310
    %v313 = vsel %vm110, %v288, 0
    %v316 = vsel %vm179, %v311, 0
    %318 = vmatpush.bf16.msra.mxu0 0
    %319 = vmatpush.bf16.msra.mxu0 0
    %320 = vmatpush.bf16.msra.mxu0 0
    %321 = vmatpush.bf16.msra.mxu0 0
    %322 = vmatpush.bf16.msra.mxu0 0
    %323 = vmatpush.bf16.msra.mxu0 0
    %324 = vmatpush.bf16.msra.mxu0 0
    %325 = vmatpush.bf16.msra.mxu0 %v316
    %326 = vmatmul.bf16.gmra.mxu0 %v313
    %v327 = vpop.f32.mrf.mxu0
    %v328 = vadd.f32 0.0, %v327
    %v329 = vpop.f32.mrf.mxu0
    %330 = vdwg.mxu0
    %v331 = vrcp.pop %v283
    %v332 = vrcp.pop %v286
    %v333 = vmul.f32 %v307, %v331
    %v334 = vmul.f32 %v328, %v332
    %v335 = vpack.c.bf16 %v333, %v333
    %v336 = vpack.c.bf16 %v334, %v334
    %337 = vrot.lane.b32.xlu0 %v107, 112
    %v338 = vpop.permute.xlu0 %337
    %339 = vrot.lane.b32.xlu0 %v107, 80
    %v340 = vpop.permute.xlu0 %339
    %v342 = vsel %vm110, %v338, 0
    %v345 = vsel %vm110, %v340, 0
    %347 = vmatpush.bf16.xpose.msra.mxu0 0
    %348 = vmatpush.bf16.xpose.msra.mxu0 0
    %349 = vmatpush.bf16.xpose.msra.mxu0 0
    %350 = vmatpush.bf16.xpose.msra.mxu0 0
    %351 = vmatpush.bf16.xpose.msra.mxu0 0
    %352 = vmatpush.bf16.xpose.msra.mxu0 0
    %353 = vmatpush.bf16.xpose.msra.mxu0 0
    %354 = vmatpush.bf16.xpose.msra.mxu0 %v345
    %355 = vmatmul.bf16.gmra.mxu0 %v342
    %v356 = vpop.f32.mrf.mxu0
    %v357 = vadd.f32 0.0, %v356
    %v358 = vpop.f32.mrf.mxu0
    %359 = vdwg.mxu0
    %360 = vrot.lane.b32.xlu0 %v132, 112
    %v361 = vpop.permute.xlu0 %360
    %362 = vrot.lane.b32.xlu0 %v132, 80
    %v363 = vpop.permute.xlu0 %362
    %v365 = vsel %vm110, %v361, 0
    %v368 = vsel %vm110, %v363, 0
    %370 = vmatpush.bf16.xpose.msra.mxu0 0
    %371 = vmatpush.bf16.xpose.msra.mxu0 0
    %372 = vmatpush.bf16.xpose.msra.mxu0 0
    %373 = vmatpush.bf16.xpose.msra.mxu0 0
    %374 = vmatpush.bf16.xpose.msra.mxu0 0
    %375 = vmatpush.bf16.xpose.msra.mxu0 0
    %376 = vmatpush.bf16.xpose.msra.mxu0 0
    %377 = vmatpush.bf16.xpose.msra.mxu0 %v368
    %378 = vmatmul.bf16.gmra.mxu0 %v365
    %v379 = vpop.f32.mrf.mxu0
    %v380 = vadd.f32 0.0, %v379
    %v381 = vpop.f32.mrf.mxu0
    %382 = vdwg.mxu0
    %v383 = vsel %vm110, %v357, -inf
    %384 = vmax.xlane.f32.xlu0 %v383
    %v385 = vpop.xlane.xlu0 %384
    %v386 = vsel %vm110, %v380, -inf
    %387 = vmax.xlane.f32.xlu0 %v386
    %v388 = vpop.xlane.xlu0 %387
    %v389 = vsub.f32 %v357, %v385
    %v390 = vsub.f32 %v380, %v388
    %v391 = vmul.f32 %v389, 1.442695
    %v392 = vpow.pop %v391
    %v393 = vmul.f32 %v390, 1.442695
    %v394 = vpow.pop %v393
    %v395 = vsel %vm110, %v392, 0.0
    %396 = vadd.xlane.f32.xlu0 %v395
    %v397 = vpop.xlane.xlu0 %396
    %v398 = vsel %vm110, %v394, 0.0
    %399 = vadd.xlane.f32.xlu0 %v398
    %v400 = vpop.xlane.xlu0 %399
    %v401 = vpack.c.bf16 %v392, %v392
    %v402 = vpack.c.bf16 %v394, %v394
    %403 = vrot.lane.b32.xlu0 %v107, 48
    %v404 = vpop.permute.xlu0 %403
    %v406 = vsel %vm110, %v401, 0
    %v409 = vsel %vm179, %v404, 0
    %411 = vmatpush.bf16.msra.mxu0 0
    %412 = vmatpush.bf16.msra.mxu0 0
    %413 = vmatpush.bf16.msra.mxu0 0
    %414 = vmatpush.bf16.msra.mxu0 0
    %415 = vmatpush.bf16.msra.mxu0 0
    %416 = vmatpush.bf16.msra.mxu0 0
    %417 = vmatpush.bf16.msra.mxu0 0
    %418 = vmatpush.bf16.msra.mxu0 %v409
    %419 = vmatmul.bf16.gmra.mxu0 %v406
    %v420 = vpop.f32.mrf.mxu0
    %v421 = vadd.f32 0.0, %v420
    %v422 = vpop.f32.mrf.mxu0
    %423 = vdwg.mxu0
    %424 = vrot.lane.b32.xlu0 %v132, 48
    %v425 = vpop.permute.xlu0 %424
    %v427 = vsel %vm110, %v402, 0
    %v430 = vsel %vm179, %v425, 0
    %432 = vmatpush.bf16.msra.mxu0 0
    %433 = vmatpush.bf16.msra.mxu0 0
    %434 = vmatpush.bf16.msra.mxu0 0
    %435 = vmatpush.bf16.msra.mxu0 0
    %436 = vmatpush.bf16.msra.mxu0 0
    %437 = vmatpush.bf16.msra.mxu0 0
    %438 = vmatpush.bf16.msra.mxu0 0
    %439 = vmatpush.bf16.msra.mxu0 %v430
    %440 = vmatmul.bf16.gmra.mxu0 %v427
    %v441 = vpop.f32.mrf.mxu0
    %v442 = vadd.f32 0.0, %v441
    %v443 = vpop.f32.mrf.mxu0
    %444 = vdwg.mxu0
    %v445 = vrcp.pop %v397
    %v446 = vrcp.pop %v400
    %v447 = vmul.f32 %v421, %v445
    %v448 = vmul.f32 %v442, %v446
    %v449 = vpack.c.bf16 %v447, %v447
    %v450 = vpack.c.bf16 %v448, %v448
    %451 = vrot.lane.b32.xlu0 %v107, 104
    %v452 = vpop.permute.xlu0 %451
    %453 = vrot.lane.b32.xlu0 %v107, 72
    %v454 = vpop.permute.xlu0 %453
    %v456 = vsel %vm110, %v452, 0
    %v459 = vsel %vm110, %v454, 0
    %461 = vmatpush.bf16.xpose.msra.mxu0 0
    %462 = vmatpush.bf16.xpose.msra.mxu0 0
    %463 = vmatpush.bf16.xpose.msra.mxu0 0
    %464 = vmatpush.bf16.xpose.msra.mxu0 0
    %465 = vmatpush.bf16.xpose.msra.mxu0 0
    %466 = vmatpush.bf16.xpose.msra.mxu0 0
    %467 = vmatpush.bf16.xpose.msra.mxu0 0
    %468 = vmatpush.bf16.xpose.msra.mxu0 %v459
    %469 = vmatmul.bf16.gmra.mxu0 %v456
    %v470 = vpop.f32.mrf.mxu0
    %v471 = vadd.f32 0.0, %v470
    %v472 = vpop.f32.mrf.mxu0
    %473 = vdwg.mxu0
    %474 = vrot.lane.b32.xlu0 %v132, 104
    %v475 = vpop.permute.xlu0 %474
    %476 = vrot.lane.b32.xlu0 %v132, 72
    %v477 = vpop.permute.xlu0 %476
    %v479 = vsel %vm110, %v475, 0
    %v482 = vsel %vm110, %v477, 0
    %484 = vmatpush.bf16.xpose.msra.mxu0 0
    %485 = vmatpush.bf16.xpose.msra.mxu0 0
    %486 = vmatpush.bf16.xpose.msra.mxu0 0
    %487 = vmatpush.bf16.xpose.msra.mxu0 0
    %488 = vmatpush.bf16.xpose.msra.mxu0 0
    %489 = vmatpush.bf16.xpose.msra.mxu0 0
    %490 = vmatpush.bf16.xpose.msra.mxu0 0
    %491 = vmatpush.bf16.xpose.msra.mxu0 %v482
    %492 = vmatmul.bf16.gmra.mxu0 %v479
    %v493 = vpop.f32.mrf.mxu0
    %v494 = vadd.f32 0.0, %v493
    %v495 = vpop.f32.mrf.mxu0
    %496 = vdwg.mxu0
    %v497 = vsel %vm110, %v471, -inf
    %498 = vmax.xlane.f32.xlu0 %v497
    %v499 = vpop.xlane.xlu0 %498
    %v500 = vsel %vm110, %v494, -inf
    %501 = vmax.xlane.f32.xlu0 %v500
    %v502 = vpop.xlane.xlu0 %501
    %v503 = vsub.f32 %v471, %v499
    %v504 = vsub.f32 %v494, %v502
    %v505 = vmul.f32 %v503, 1.442695
    %v506 = vpow.pop %v505
    %v507 = vmul.f32 %v504, 1.442695
    %v508 = vpow.pop %v507
    %v509 = vsel %vm110, %v506, 0.0
    %510 = vadd.xlane.f32.xlu0 %v509
    %v511 = vpop.xlane.xlu0 %510
    %v512 = vsel %vm110, %v508, 0.0
    %513 = vadd.xlane.f32.xlu0 %v512
    %v514 = vpop.xlane.xlu0 %513
    %v515 = vpack.c.bf16 %v506, %v506
    %v516 = vpack.c.bf16 %v508, %v508
    %517 = vrot.lane.b32.xlu0 %v107, 40
    %v518 = vpop.permute.xlu0 %517
    %v520 = vsel %vm110, %v515, 0
    %v523 = vsel %vm179, %v518, 0
    %525 = vmatpush.bf16.msra.mxu0 0
    %526 = vmatpush.bf16.msra.mxu0 0
    %527 = vmatpush.bf16.msra.mxu0 0
    %528 = vmatpush.bf16.msra.mxu0 0
    %529 = vmatpush.bf16.msra.mxu0 0
    %530 = vmatpush.bf16.msra.mxu0 0
    %531 = vmatpush.bf16.msra.mxu0 0
    %532 = vmatpush.bf16.msra.mxu0 %v523
    %533 = vmatmul.bf16.gmra.mxu0 %v520
    %v534 = vpop.f32.mrf.mxu0
    %v535 = vadd.f32 0.0, %v534
    %v536 = vpop.f32.mrf.mxu0
    %537 = vdwg.mxu0
    %538 = vrot.lane.b32.xlu0 %v132, 40
    %v539 = vpop.permute.xlu0 %538
    %v541 = vsel %vm110, %v516, 0
    %v544 = vsel %vm179, %v539, 0
    %546 = vmatpush.bf16.msra.mxu0 0
    %547 = vmatpush.bf16.msra.mxu0 0
    %548 = vmatpush.bf16.msra.mxu0 0
    %549 = vmatpush.bf16.msra.mxu0 0
    %550 = vmatpush.bf16.msra.mxu0 0
    %551 = vmatpush.bf16.msra.mxu0 0
    %552 = vmatpush.bf16.msra.mxu0 0
    %553 = vmatpush.bf16.msra.mxu0 %v544
    %554 = vmatmul.bf16.gmra.mxu0 %v541
    %v555 = vpop.f32.mrf.mxu0
    %v556 = vadd.f32 0.0, %v555
    %v557 = vpop.f32.mrf.mxu0
    %558 = vdwg.mxu0
    %v559 = vrcp.pop %v511
    %v560 = vrcp.pop %v514
    %v561 = vmul.f32 %v535, %v559
    %v562 = vmul.f32 %v556, %v560
    %v563 = vpack.c.bf16 %v561, %v561
    %v564 = vpack.c.bf16 %v562, %v562
    %v567 = vunpack.c.l.b16 %v221
    %v568 = vunpack.c.l.b16 %v222
    %v569 = vpack.c.b16 %v568, %v567
    %v572 = vunpack.c.l.b16 %v335
    %v573 = vunpack.c.l.b16 %v336
    %v574 = vpack.c.b16 %v573, %v572
    %575 = vrot.lane.b32.xlu0 %v574, 8
    %v576 = vpop.permute.xlu0 %575
    %v579 = vunpack.c.l.b16 %v449
    %v580 = vunpack.c.l.b16 %v450
    %v581 = vpack.c.b16 %v580, %v579
    %582 = vrot.lane.b32.xlu0 %v581, 16
    %v583 = vpop.permute.xlu0 %582
    %v586 = vunpack.c.l.b16 %v563
    %v587 = vunpack.c.l.b16 %v564
    %v588 = vpack.c.b16 %v587, %v586
    %589 = vrot.lane.b32.xlu0 %v588, 24
    %v590 = vpop.permute.xlu0 %589
    %v593 = vsel %vm110, %v569, %v576
    %vm594 = vcmask 130048
    %v596 = vsel %vm594, %v593, %v583
    %vm597 = vcmask 195584
    %v599 = vsel %vm597, %v596, %v590
    %v600 = vld [vmem:[#allocation2] sm:$0xf]
    %v601 = vld [vmem:[#allocation2 + $0x4] sm:$0xf]
    %v602 = vld [vmem:[#allocation2 + $0x8] sm:$0xf]
    %v603 = vld [vmem:[#allocation2 + $0xc] sm:$0xf]
    %v604 = vld [vmem:[%s4] sm:$0x1]
    %v606 = vperm.slane %v604, 0
    %v612 = vunpack.c.l.b16 %v600
    %v613 = vunpack.c.l.b16 %v601
    %v614 = vunpack.c.l.b16 %v602
    %v615 = vunpack.c.l.b16 %v603
    %v616 = vpack.c.b16 %v613, %v612
    %v617 = vpack.c.b16 %v615, %v614
    %v620 = vsel %vm85, %v599, 0
    %622 = vmatpush.bf16.msra.mxu0 0
    %623 = vmatpush.bf16.msra.mxu0 0
    %624 = vmatpush.bf16.msra.mxu0 0
    %625 = vmatpush.bf16.msra.mxu0 0
    %626 = vmatpush.bf16.msra.mxu0 0
    %627 = vmatpush.bf16.msra.mxu0 0
    %628 = vmatpush.bf16.msra.mxu0 %v617
    %629 = vmatpush.bf16.msra.mxu0 %v616
    %630 = vmatmul.bf16.gmra.mxu0 %v620
    %v631 = vpop.f32.mrf.mxu0
    %v632 = vadd.f32 %v606, %v631
    %v633 = vpop.f32.mrf.mxu0
    %v634 = vadd.f32 %v606, %v633
    %635 = vdwg.mxu0
    %v636 = vsel %vm85, %v632, 0.0
    %v637 = vrot.slane %v636, 4
    %v638 = vadd.f32 %v636, %v637
    %v639 = vrot.slane %v638, 2
    %v640 = vadd.f32 %v638, %v639
    %v641 = vrot.slane %v640, 1
    %v642 = vadd.f32 %v640, %v641
    %v643 = vsel %vm85, %v634, 0.0
    %v644 = vrot.slane %v643, 4
    %v645 = vadd.f32 %v643, %v644
    %v646 = vrot.slane %v645, 2
    %v647 = vadd.f32 %v645, %v646
    %v648 = vrot.slane %v647, 1
    %v649 = vadd.f32 %v647, %v648
    %v650 = vrcp.pop 8.0
    %v651 = vmul.f32 8.0, %v650
    %v652 = vsub.f32 1.0, %v651
    %v653 = vmul.f32 %v650, %v652
    %v654 = vadd.f32 %v650, %v653
    %vm655 = vweird.f32 %v650
    %v656 = vsel %vm655, %v650, %v654
    %v657 = vmul.f32 %v642, %v656
    %v658 = vmul.f32 %v649, %v656
    %v659 = vsub.f32 %v632, %v657
    %v660 = vsub.f32 %v634, %v658
    %v661 = vmul.f32 %v659, %v659
    %v662 = vmul.f32 %v660, %v660
    %v663 = vsel %vm85, %v661, 0.0
    %v664 = vrot.slane %v663, 4
    %v665 = vadd.f32 %v663, %v664
    %v666 = vrot.slane %v665, 2
    %v667 = vadd.f32 %v665, %v666
    %v668 = vrot.slane %v667, 1
    %v669 = vadd.f32 %v667, %v668
    %v670 = vsel %vm85, %v662, 0.0
    %v671 = vrot.slane %v670, 4
    %v672 = vadd.f32 %v670, %v671
    %v673 = vrot.slane %v672, 2
    %v674 = vadd.f32 %v672, %v673
    %v675 = vrot.slane %v674, 1
    %v676 = vadd.f32 %v674, %v675
    %v677 = vmul.f32 %v669, 0.14285715
    %v678 = vmul.f32 %v676, 0.14285715
    %v679 = vrsqrt.pop %v677
    %v680 = vmul.f32 %v679, %v677
    %v681 = vmul.f32 %v680, %v679
    %v682 = vmul.f32 0.5, %v681
    %v683 = vsub.f32 1.5, %v682
    %v684 = vmul.f32 %v679, %v683
    %v685 = vmul.f32 %v677, %v684
    %vm686 = vcmp.eq.f32.partialorder %v677, inf
    %v687 = vsel %vm686, %v677, %v685
    %vm688 = vcmp.eq.f32.partialorder %v677, 0.0
    %v689 = vand.u32 %v677, 2147483648
    %v690 = vsel %vm688, %v689, %v687
    %v691 = vrsqrt.pop %v678
    %v692 = vmul.f32 %v691, %v678
    %v693 = vmul.f32 %v692, %v691
    %v694 = vmul.f32 0.5, %v693
    %v695 = vsub.f32 1.5, %v694
    %v696 = vmul.f32 %v691, %v695
    %v697 = vmul.f32 %v678, %v696
    %vm698 = vcmp.eq.f32.partialorder %v678, inf
    %v699 = vsel %vm698, %v678, %v697
    %vm700 = vcmp.eq.f32.partialorder %v678, 0.0
    %v701 = vand.u32 %v678, 2147483648
    %v702 = vsel %vm700, %v701, %v699
    %v703 = vpack.c.bf16 %v657, %v657
    %v704 = vpack.c.bf16 %v658, %v658
    %v705 = vld [vmem:[%s5] sm:$0xf]
    %v706 = vld [vmem:[%s5 + $0x4] sm:$0xf]
    %v707 = vld [vmem:[%s5 + $0x8] sm:$0xf]
    %v708 = vld [vmem:[%s5 + $0xc] sm:$0xf]
    %v709 = vpack.c.bf16 %v690, %v690
    %v710 = vpack.c.bf16 %v702, %v702
    %v711 = vld [vmem:[%s6] sm:$0xf]
    %v712 = vld [vmem:[%s6 + $0x4] sm:$0xf]
    %v713 = vld [vmem:[%s6 + $0x8] sm:$0xf]
    %v714 = vld [vmem:[%s6 + $0xc] sm:$0xf]
    %v717 = vunpack.c.l.b16 %v709
    %v718 = vunpack.c.l.b16 %v710
    %vm719 = vcmask 1041409
    %v720 = vsel %vm719, %v718, %v717
    %v721 = vpack.c.b16 %v720, %v720
    %v726 = vunpack.c.l.b16 %v711
    %v727 = vunpack.c.l.b16 %v712
    %v728 = vunpack.c.l.b16 %v713
    %v729 = vunpack.c.l.b16 %v714
    %v730 = vpack.c.b16 %v727, %v726
    %v731 = vpack.c.b16 %v729, %v728
    %v735 = vsel %vm85, %v721, 0
    %737 = vmatpush.bf16.msra.mxu0 0
    %738 = vmatpush.bf16.msra.mxu0 0
    %739 = vmatpush.bf16.msra.mxu0 0
    %740 = vmatpush.bf16.msra.mxu0 0
    %741 = vmatpush.bf16.msra.mxu0 0
    %742 = vmatpush.bf16.msra.mxu0 0
    %743 = vmatpush.bf16.msra.mxu0 %v731
    %744 = vmatpush.bf16.msra.mxu0 %v730
    %745 = vmatmul.bf16.gmra.mxu0 %v735
    %v746 = vpop.f32.mrf.mxu0
    %v747 = vadd.f32 0.0, %v746
    %v748 = vpop.f32.mrf.mxu0
    %749 = vdwg.mxu0
    %v752 = vunpack.c.l.b16 %v703
    %v753 = vunpack.c.l.b16 %v704
    %v754 = vsel %vm719, %v753, %v752
    %v755 = vpack.c.b16 %v754, %v754
    %v760 = vunpack.c.l.b16 %v705
    %v761 = vunpack.c.l.b16 %v706
    %v762 = vunpack.c.l.b16 %v707
    %v763 = vunpack.c.l.b16 %v708
    %v764 = vpack.c.b16 %v761, %v760
    %v765 = vpack.c.b16 %v763, %v762
    %v769 = vsel %vm85, %v755, 0
    %771 = vmatpush.bf16.msra.mxu0 0
    %772 = vmatpush.bf16.msra.mxu0 0
    %773 = vmatpush.bf16.msra.mxu0 0
    %774 = vmatpush.bf16.msra.mxu0 0
    %775 = vmatpush.bf16.msra.mxu0 0
    %776 = vmatpush.bf16.msra.mxu0 0
    %777 = vmatpush.bf16.msra.mxu0 %v765
    %778 = vmatpush.bf16.msra.mxu0 %v764
    %779 = vmatmul.bf16.gmra.mxu0 %v769
    %v780 = vpop.f32.mrf.mxu0
    %v781 = vadd.f32 %v747, %v780
    %v782 = vpop.f32.mrf.mxu0
    %783 = vdwg.mxu0
    %v784 = vld [vmem:[%s7] sm:$0x1]
    %v786 = vperm.slane %v784, 0
    %v788 = vadd.f32 %v781, %v786
    %v789 = vpack.c.bf16 %v788, %v788
    %v790 = vld [vmem:[%s8] sm:$0xf]
    %v791 = vld [vmem:[%s8 + $0x4] sm:$0xf]
    %v792 = vld [vmem:[%s9] sm:$0x1]
    %v794 = vperm.slane %v792, 0
    %v798 = vunpack.c.l.b16 %v790
    %v799 = vunpack.c.l.b16 %v791
    %v800 = vpack.c.b16 %v799, %v798
    %v803 = vsel %vm594, %v789, 0
    %805 = vmatpush.bf16.msra.mxu0 0
    %806 = vmatpush.bf16.msra.mxu0 0
    %807 = vmatpush.bf16.msra.mxu0 0
    %808 = vmatpush.bf16.msra.mxu0 0
    %809 = vmatpush.bf16.msra.mxu0 0
    %810 = vmatpush.bf16.msra.mxu0 0
    %811 = vmatpush.bf16.msra.mxu0 0
    %812 = vmatpush.bf16.msra.mxu0 %v800
    %813 = vmatmul.bf16.gmra.mxu0 %v803
    %v814 = vpop.f32.mrf.mxu0
    %v815 = vadd.f32 %v794, %v814
    %v816 = vpop.f32.mrf.mxu0
    %817 = vdwg.mxu0
    %vm818 = vcmask 123904
    %819 = vst.msk [vmem:[#allocation6] sm:$0x3] %vm818, %v788
    %vm820 = vcmask 25600
    %821 = vst.msk [vmem:[#allocation5] sm:$0x3] %vm820, %v815
    // Predicated region
    $region46: #{tpu_custom_call.1} parent=1 // pred_check
      _
    $region47: #{tpu_custom_call.1} parent=1 // pred_check_branch
      %823 = sbr.rel (0) target = $region49
    $region48: #{tpu_custom_call.1} parent=1 // pred_region
      %825 = vsyncadd [#allocation4], 0
      %s827 = sshll.u32 [#allocation5], 4
      %s828 = int_to_ptr.vmem [resolvable:$true] %s827
      %s829 = sshll.u32 %s10, 4
      %s830 = int_to_ptr.hbm [resolvable:$true] %s829
      %832 = dma.vmem_to_hbm [thread:$0]  %s828, 32, %s830, [#allocation4]
    $region49: #{tpu_custom_call.1} parent=1 // pred_fallthru
      _
    // Predicated region
    $region50: #{tpu_custom_call.1} parent=1 // pred_check
      _
    $region51: #{tpu_custom_call.1} parent=1 // pred_check_branch
      %834 = sbr.rel (0) target = $region53
    $region52: #{tpu_custom_call.1} parent=1 // pred_region
      %836 = vsyncadd [#allocation7], 0
      %s838 = sshll.u32 [#allocation6], 4
      %s839 = int_to_ptr.vmem [resolvable:$true] %s838
      %s840 = sshll.u32 %s11, 4
      %s841 = int_to_ptr.hbm [resolvable:$true] %s840
      %843 = dma.vmem_to_hbm [thread:$0]  %s839, 32, %s841, [#allocation7]
    $region53: #{tpu_custom_call.1} parent=1 // pred_fallthru
      _
    // Predicated region
    $region54: #{tpu_custom_call.1} parent=1 // pred_check
      _
    $region55: #{tpu_custom_call.1} parent=1 // pred_check_branch
      %845 = sbr.rel (0) target = $region57
    $region56: #{tpu_custom_call.1} parent=1 // pred_region
      %847 = dma.done [#allocation4], 32
    $region57: #{tpu_custom_call.1} parent=1 // pred_fallthru
      _
    // Predicated region
    $region58: #{tpu_custom_call.1} parent=1 // pred_check
      _
    $region59: #{tpu_custom_call.1} parent=1 // pred_check_branch
      %849 = sbr.rel (0) target = $region61
    $region60: #{tpu_custom_call.1} parent=1 // pred_region
      %851 = dma.done [#allocation7], 32
    $region61: #{tpu_custom_call.1} parent=1 // pred_fallthru
      _
    %852 = vsyncpa [#allocation3], 1
    %853 = vsyncpa [#allocation4], 1
    %854 = vsyncpa [#allocation7], 1

</llo_original>
